<compile_context>
chip_gen: v6e
topology: v6e:2x2x1
jax: 0.10.0
libtpu: 0.0.40
codegen_flags: <defaults>
</compile_context>

<pallas_src>
import jax
import jax.numpy as jnp
from jax.experimental import pallas as pl
from jax.experimental.pallas import tpu as pltpu

# --- synthetic "environment" sizes (CartPole-like) -------------------------
N_STATES = 4      # env.observation_space.shape[0]
N_ACTIONS = 2     # env.action_space.n
HIDDEN = 50       # fc1 output width (from the module definition)

SUBLANE = 8
H_PAD = 128       # padded HIDDEN (lane width for the layer-1 output / MXU K)
MAX_TILE_B = 1024 # keeps double-buffered tiles far below any scoped-VMEM limit


def _round_up(n, m):
    return (n + m - 1) // m * m


def _net_kernel(x_ref, w1_ref, b1_ref, w2_ref, b2_ref, out_ref):
    x = x_ref[...]        # (tile_b, N_STATES) f32
    w1 = w1_ref[...]      # (N_STATES, H_PAD) f32 (cols >= HIDDEN are zero)

    # ---- layer 1: K = 4 contraction -> VPU broadcast-FMAs (MXU would be idle)
    h = x[:, 0:1] * w1[0:1, :]
    for k in range(1, N_STATES):
        h = h + x[:, k:k + 1] * w1[k:k + 1, :]
    h = jnp.maximum(h + b1_ref[...], 0.0)            # bias + ReLU in f32

    # ---- layer 2: (tile_b, 128) @ (128, N_ACTIONS) on the MXU, f32 accum.
    # Rows >= HIDDEN of w2 are zero, matching the zero-padded cols of h.
    y = jnp.dot(h, w2_ref[...], preferred_element_type=jnp.float32)
    out_ref[...] = (y + b2_ref[...]).astype(out_ref.dtype)


def prepare_params(w1, b1, w2, b2):
    """One-time parameter prep (do at init, reuse across forward calls)."""
    w1_p = jnp.zeros((N_STATES, H_PAD), jnp.float32).at[:, :HIDDEN].set(w1)
    b1_p = jnp.zeros((1, H_PAD), jnp.float32).at[:, :HIDDEN].set(
        jnp.reshape(b1, (1, HIDDEN)))
    w2_p = jnp.zeros((H_PAD, N_ACTIONS), jnp.float32).at[:HIDDEN, :].set(w2)
    b2_p = jnp.reshape(b2, (1, N_ACTIONS)).astype(jnp.float32)
    return w1_p, b1_p, w2_p, b2_p


def net_forward(x, params, *, tile_b=None):
    """x: (B, N_STATES) f32; params = prepare_params(w1, b1, w2, b2).
    Returns (B, N_ACTIONS) f32 == relu(x @ w1 + b1) @ w2 + b2."""
    w1_p, b1_p, w2_p, b2_p = params
    B = x.shape[0]
    b_pad = _round_up(B, SUBLANE)

    if tile_b is None:
        if B >= 16:
            # >=2 grid steps so the "parallel" axis can use both v7x TCs;
            # still large tiles (up to MAX_TILE_B) for single-TC v5e/v6e.
            tile_b = _round_up(pl.cdiv(B, 2), SUBLANE)
        else:
            tile_b = b_pad
    tile_b = max(SUBLANE, _round_up(tile_b, SUBLANE))
    tile_b = min(tile_b, MAX_TILE_B, b_pad)
    grid_b = pl.cdiv(b_pad, tile_b)

    x_p = x.astype(jnp.float32)
    if b_pad != B:
        x_p = jnp.pad(x_p, ((0, b_pad - B), (0, 0)))   # zero rows are inert

    out = pl.pallas_call(
        _net_kernel,
        out_shape=jax.ShapeDtypeStruct((b_pad, N_ACTIONS), jnp.float32),
        grid=(grid_b,),
        in_specs=[
            pl.BlockSpec((tile_b, N_STATES), lambda i: (i, 0)),   # x: batch-tiled
            pl.BlockSpec((N_STATES, H_PAD), lambda i: (0, 0)),    # W1: resident
            pl.BlockSpec((1, H_PAD), lambda i: (0, 0)),           # b1: resident
            pl.BlockSpec((H_PAD, N_ACTIONS), lambda i: (0, 0)),   # W2: resident
            pl.BlockSpec((1, N_ACTIONS), lambda i: (0, 0)),       # b2: resident
        ],
        out_specs=pl.BlockSpec((tile_b, N_ACTIONS), lambda i: (i, 0)),
        compiler_params=pltpu.CompilerParams(
            dimension_semantics=("parallel",)),   # v7x: shard batch over 2 TCs
    )(x_p, w1_p, b1_p, w2_p, b2_p)

    return out[:B]


def init_params(key):
    """Deterministic init mirroring the PyTorch module:
    weights ~ Normal(0, 0.1); biases use the default Linear uniform init."""
    k1, k2, k3, k4 = jax.random.split(key, 4)
    w1 = 0.1 * jax.random.normal(k1, (N_STATES, HIDDEN), dtype=jnp.float32)
    w2 = 0.1 * jax.random.normal(k2, (HIDDEN, N_ACTIONS), dtype=jnp.float32)
    bound1 = 1.0 / jnp.sqrt(N_STATES)
    bound2 = 1.0 / jnp.sqrt(HIDDEN)
    b1 = jax.random.uniform(k3, (1, HIDDEN), jnp.float32, -bound1, bound1)
    b2 = jax.random.uniform(k4, (1, N_ACTIONS), jnp.float32, -bound2, bound2)
    return w1, b1, w2, b2


def _reference(x, w1, b1, w2, b2):
    return jnp.maximum(x @ w1 + b1, 0.0) @ w2 + b2


if __name__ == "__main__":
    key = jax.random.PRNGKey(0)
    kx, kp, kx2, kx3 = jax.random.split(key, 4)
    w1, b1, w2, b2 = init_params(kp)
    params = prepare_params(w1, b1, w2, b2)          # one-time param prep

    # Small batch (module-sized test): B=2 states of dimension N_STATES=4.
    B = 2
    x = jax.random.normal(kx, (B, N_STATES), dtype=jnp.float32)
    actions_value = net_forward(x, params)
    jax.block_until_ready(actions_value)
    assert actions_value.shape == (B, N_ACTIONS)
    assert jnp.allclose(actions_value, _reference(x, w1, b1, w2, b2),
                        atol=1e-5, rtol=1e-5)

    # Multi-step grid check (explicit tile): batch axis actually iterates.
    B2 = 64
    x2 = jax.random.normal(kx2, (B2, N_STATES), dtype=jnp.float32)
    av2 = net_forward(x2, params, tile_b=16)
    jax.block_until_ready(av2)
    assert av2.shape == (B2, N_ACTIONS)
    assert jnp.allclose(av2, _reference(x2, w1, b1, w2, b2),
                        atol=1e-5, rtol=1e-5)

    # Ragged batch check: exercises round_up(B, 8) + cdiv grid (partial last tile).
    B3 = 50
    x3 = jax.random.normal(kx3, (B3, N_STATES), dtype=jnp.float32)
    av3 = net_forward(x3, params)
    jax.block_until_ready(av3)
    assert av3.shape == (B3, N_ACTIONS)
    assert jnp.allclose(av3, _reference(x3, w1, b1, w2, b2),
                        atol=1e-5, rtol=1e-5)

    print("KERNEL_OK")
</pallas_src>

<mosaic_0001>
module attributes {stable_mosaic.version = 11 : i64} {
  func.func @_net_kernel(%arg0: i32, %arg1: memref<8x4xf32, #tpu.memory_space<vmem>>, %arg2: memref<4x128xf32, #tpu.memory_space<vmem>>, %arg3: memref<1x128xf32, #tpu.memory_space<vmem>>, %arg4: memref<128x2xf32, #tpu.memory_space<vmem>>, %arg5: memref<1x2xf32, #tpu.memory_space<vmem>>, %arg6: memref<8x2xf32, #tpu.memory_space<vmem>>) attributes {dimension_semantics = [#tpu.dimension_semantics<parallel>], iteration_bounds = array<i64: 1>, scalar_prefetch = 0 : i64, scratch_operands = 0 : i64, tpu.core_type = #tpu.core_type<tc>, window_params = [{transform_indices = @transform_0, window_bounds = array<i64: 8, 4>}, {pipeline_mode = #tpu.pipeline_mode<synchronous>, transform_indices = @transform_1, window_bounds = array<i64: 4, 128>}, {pipeline_mode = #tpu.pipeline_mode<synchronous>, transform_indices = @transform_2, window_bounds = array<i64: 1, 128>}, {pipeline_mode = #tpu.pipeline_mode<synchronous>, transform_indices = @transform_3, window_bounds = array<i64: 128, 2>}, {pipeline_mode = #tpu.pipeline_mode<synchronous>, transform_indices = @transform_4, window_bounds = array<i64: 1, 2>}, {transform_indices = @transform_5, window_bounds = array<i64: 8, 2>}]} {
    %c0 = arith.constant 0 : index
    %c0_0 = arith.constant 0 : index
    %0 = vector.load %arg1[%c0, %c0_0] : memref<8x4xf32, #tpu.memory_space<vmem>>, vector<8x4xf32>
    %c0_1 = arith.constant 0 : index
    %c0_2 = arith.constant 0 : index
    %1 = vector.load %arg2[%c0_1, %c0_2] : memref<4x128xf32, #tpu.memory_space<vmem>>, vector<4x128xf32>
    %2 = vector.extract_strided_slice %0 {offsets = [0, 0], sizes = [8, 1], strides = [1, 1]} : vector<8x4xf32> to vector<8x1xf32>
    %3 = vector.extract_strided_slice %1 {offsets = [0, 0], sizes = [1, 128], strides = [1, 1]} : vector<4x128xf32> to vector<1x128xf32>
    %4 = vector.broadcast %2 : vector<8x1xf32> to vector<8x128xf32>
    %5 = vector.broadcast %3 : vector<1x128xf32> to vector<8x128xf32>
    %6 = arith.mulf %4, %5 : vector<8x128xf32>
    %7 = vector.extract_strided_slice %0 {offsets = [0, 1], sizes = [8, 1], strides = [1, 1]} : vector<8x4xf32> to vector<8x1xf32>
    %8 = vector.extract_strided_slice %1 {offsets = [1, 0], sizes = [1, 128], strides = [1, 1]} : vector<4x128xf32> to vector<1x128xf32>
    %9 = vector.broadcast %7 : vector<8x1xf32> to vector<8x128xf32>
    %10 = vector.broadcast %8 : vector<1x128xf32> to vector<8x128xf32>
    %11 = arith.mulf %9, %10 : vector<8x128xf32>
    %12 = arith.addf %6, %11 : vector<8x128xf32>
    %13 = vector.extract_strided_slice %0 {offsets = [0, 2], sizes = [8, 1], strides = [1, 1]} : vector<8x4xf32> to vector<8x1xf32>
    %14 = vector.extract_strided_slice %1 {offsets = [2, 0], sizes = [1, 128], strides = [1, 1]} : vector<4x128xf32> to vector<1x128xf32>
    %15 = vector.broadcast %13 : vector<8x1xf32> to vector<8x128xf32>
    %16 = vector.broadcast %14 : vector<1x128xf32> to vector<8x128xf32>
    %17 = arith.mulf %15, %16 : vector<8x128xf32>
    %18 = arith.addf %12, %17 : vector<8x128xf32>
    %19 = vector.extract_strided_slice %0 {offsets = [0, 3], sizes = [8, 1], strides = [1, 1]} : vector<8x4xf32> to vector<8x1xf32>
    %20 = vector.extract_strided_slice %1 {offsets = [3, 0], sizes = [1, 128], strides = [1, 1]} : vector<4x128xf32> to vector<1x128xf32>
    %21 = vector.broadcast %19 : vector<8x1xf32> to vector<8x128xf32>
    %22 = vector.broadcast %20 : vector<1x128xf32> to vector<8x128xf32>
    %23 = arith.mulf %21, %22 : vector<8x128xf32>
    %24 = arith.addf %18, %23 : vector<8x128xf32>
    %c0_3 = arith.constant 0 : index
    %c0_4 = arith.constant 0 : index
    %25 = vector.load %arg3[%c0_3, %c0_4] : memref<1x128xf32, #tpu.memory_space<vmem>>, vector<1x128xf32>
    %26 = vector.broadcast %25 : vector<1x128xf32> to vector<8x128xf32>
    %27 = arith.addf %24, %26 : vector<8x128xf32>
    %cst = arith.constant 0.000000e+00 : f32
    %28 = vector.broadcast %cst : f32 to vector<8x128xf32>
    %29 = arith.maximumf %27, %28 : vector<8x128xf32>
    %c0_5 = arith.constant 0 : index
    %c0_6 = arith.constant 0 : index
    %30 = vector.load %arg4[%c0_5, %c0_6] : memref<128x2xf32, #tpu.memory_space<vmem>>, vector<128x2xf32>
    %cst_7 = arith.constant dense<0.000000e+00> : vector<8x2xf32>
    %31 = tpu.matmul %29, %30, %cst_7 {dimension_numbers = #tpu.dot_dimension_numbers<[1], [0], [0], [1], [0, 0, 1, 1], [], []>} : vector<8x128xf32>, vector<128x2xf32>, vector<8x2xf32> -> vector<8x2xf32>
    %c0_8 = arith.constant 0 : index
    %c0_9 = arith.constant 0 : index
    %32 = vector.load %arg5[%c0_8, %c0_9] : memref<1x2xf32, #tpu.memory_space<vmem>>, vector<1x2xf32>
    %33 = vector.broadcast %32 : vector<1x2xf32> to vector<8x2xf32>
    %34 = arith.addf %31, %33 : vector<8x2xf32>
    %c0_10 = arith.constant 0 : index
    %c0_11 = arith.constant 0 : index
    %35 = vector.load %arg6[%c0_10, %c0_11] : memref<8x2xf32, #tpu.memory_space<vmem>>, vector<8x2xf32>
    tpu.vector_store %arg6[%c0_10, %c0_11], %34 {strides = array<i32>} : memref<8x2xf32, #tpu.memory_space<vmem>>, vector<8x2xf32>,
    return
  }
  func.func @transform_0(%arg0: i32) -> (i32, i32) {
    %c0_i32 = arith.constant 0 : i32
    %c0_i32_0 = arith.constant 0 : i32
    return %arg0, %c0_i32 : i32, i32
  }
  func.func @transform_1(%arg0: i32) -> (i32, i32) {
    %c0_i32 = arith.constant 0 : i32
    %c0_i32_0 = arith.constant 0 : i32
    %c0_i32_1 = arith.constant 0 : i32
    return %c0_i32, %c0_i32_0 : i32, i32
  }
  func.func @transform_2(%arg0: i32) -> (i32, i32) {
    %c0_i32 = arith.constant 0 : i32
    %c0_i32_0 = arith.constant 0 : i32
    %c0_i32_1 = arith.constant 0 : i32
    return %c0_i32, %c0_i32_0 : i32, i32
  }
  func.func @transform_3(%arg0: i32) -> (i32, i32) {
    %c0_i32 = arith.constant 0 : i32
    %c0_i32_0 = arith.constant 0 : i32
    %c0_i32_1 = arith.constant 0 : i32
    return %c0_i32, %c0_i32_0 : i32, i32
  }
  func.func @transform_4(%arg0: i32) -> (i32, i32) {
    %c0_i32 = arith.constant 0 : i32
    %c0_i32_0 = arith.constant 0 : i32
    %c0_i32_1 = arith.constant 0 : i32
    return %c0_i32, %c0_i32_0 : i32, i32
  }
  func.func @transform_5(%arg0: i32) -> (i32, i32) {
    %c0_i32 = arith.constant 0 : i32
    %c0_i32_0 = arith.constant 0 : i32
    return %arg0, %c0_i32 : i32, i32
  }
}

</mosaic_0001>

<llo_original>
// kernel: tpu_custom_call.1
$region0: #{tpu_custom_call.1}
  #allocation0 [shape = 'u32[]', space=smem, size = 0x4, offset = 0x4, fixed_abs, tag = 'smem constant byte address 0x4 - core index']
  #allocation1 [shape = 'u32[144,128]{1,0:T(1,128)}', space=vmem, size = 0x12000, scoped, tag = 'internal scratch']
  %s0 = inlined_call_operand.vmem [shape: f32[8,4], index: 0, kind: input, shape index: {}]
  %s1 = inlined_call_operand.vmem [shape: f32[4,128], index: 1, kind: input, shape index: {}]
  %s2 = inlined_call_operand.vmem [shape: f32[1,128], index: 2, kind: input, shape index: {}]
  %s3 = inlined_call_operand.vmem [shape: f32[128,2], index: 3, kind: input, shape index: {}]
  %s4 = inlined_call_operand.vmem [shape: f32[1,2], index: 4, kind: input, shape index: {}]
  %s5 = inlined_call_operand.vmem [shape: f32[8,2], index: 5, kind: output, shape index: {}]
  %s6 = sld [smem:[#allocation0]]
  $region30: #{tpu_custom_call.1} parent=0
    _
  %s8 = ssub.s32 1, %s6
  %s9 = scalar_select 0, %s8, %s6
  // Predicated region
  $region2: #{tpu_custom_call.1} parent=0 // pred_check
    _
  $region3: #{tpu_custom_call.1} parent=0 // pred_check_branch
    %11 = sbr.rel (0) target = $region5
  $region4: #{tpu_custom_call.1} parent=0 // pred_region
    _
  $region5: #{tpu_custom_call.1} parent=0 // pred_fallthru
    _
  // Predicated region
  $region6: #{tpu_custom_call.1} parent=0 // pred_check
    _
  $region7: #{tpu_custom_call.1} parent=0 // pred_check_branch
    %13 = sbr.rel (0) target = $region9
  $region8: #{tpu_custom_call.1} parent=0 // pred_region
    _
  $region9: #{tpu_custom_call.1} parent=0 // pred_fallthru
    _
  // Predicated region
  $region10: #{tpu_custom_call.1} parent=0 // pred_check
    _
  $region11: #{tpu_custom_call.1} parent=0 // pred_check_branch
    %15 = sbr.rel (0) target = $region13
  $region12: #{tpu_custom_call.1} parent=0 // pred_region
    _
  $region13: #{tpu_custom_call.1} parent=0 // pred_fallthru
    _
  // Predicated region
  $region14: #{tpu_custom_call.1} parent=0 // pred_check
    _
  $region15: #{tpu_custom_call.1} parent=0 // pred_check_branch
    %17 = sbr.rel (0) target = $region17
  $region16: #{tpu_custom_call.1} parent=0 // pred_region
    _
  $region17: #{tpu_custom_call.1} parent=0 // pred_fallthru
    _
  // Predicated region
  $region18: #{tpu_custom_call.1} parent=0 // pred_check
    _
  $region19: #{tpu_custom_call.1} parent=0 // pred_check_branch
    %19 = sbr.rel (0) target = $region21
  $region20: #{tpu_custom_call.1} parent=0 // pred_region
    _
  $region21: #{tpu_custom_call.1} parent=0 // pred_fallthru
    _
  %v20 = vld [vmem:[%s0] sm:$0xff]
  %v21 = vld [vmem:[%s1] sm:$0xf]
  %23 = vset.pattern.permute.xlu0 0
  %24 = vperm.xlu0 %23, %v20
  %v25 = vpop.permute.xlu0 %24
  %v27 = vlaneseq
  %v28 = vshrl.u32 %v27, 7
  %v29 = vsub.s32 0, %v28
  %v30 = vrot.slane %v21, %v29
  %v31 = vmul.f32 %v25, %v30
  %32 = vset.pattern.permute.xlu0 1
  %33 = vperm.xlu0 %32, %v20
  %v34 = vpop.permute.xlu0 %33
  %v36 = vlaneseq
  %v37 = vshrl.u32 %v36, 7
  %v38 = vsub.s32 1, %v37
  %v39 = vrot.slane %v21, %v38
  %v40 = vmul.f32 %v34, %v39
  %v41 = vadd.f32 %v31, %v40
  %42 = vset.pattern.permute.xlu0 2
  %43 = vperm.xlu0 %42, %v20
  %v44 = vpop.permute.xlu0 %43
  %v46 = vlaneseq
  %v47 = vshrl.u32 %v46, 7
  %v48 = vsub.s32 2, %v47
  %v49 = vrot.slane %v21, %v48
  %v50 = vmul.f32 %v44, %v49
  %v51 = vadd.f32 %v41, %v50
  %52 = vset.pattern.permute.xlu0 3
  %53 = vperm.xlu0 %52, %v20
  %v54 = vpop.permute.xlu0 %53
  %v56 = vlaneseq
  %v57 = vshrl.u32 %v56, 7
  %v58 = vsub.s32 3, %v57
  %v59 = vrot.slane %v21, %v58
  %v60 = vmul.f32 %v54, %v59
  %v61 = vadd.f32 %v51, %v60
  %v62 = vld [vmem:[%s2] sm:$0x1]
  %v64 = vlaneseq
  %v65 = vshrl.u32 %v64, 7
  %v66 = vsub.s32 0, %v65
  %v67 = vrot.slane %v62, %v66
  %v69 = vadd.f32 %v61, %v67
  %v70 = vmax.f32 %v69, 0.0
  %v71 = vld [vmem:[%s3] sm:$0xff]
  %v72 = vld [vmem:[%s3 + $0x8] sm:$0xff]
  %v73 = vld [vmem:[%s3 + $0x10] sm:$0xff]
  %v74 = vld [vmem:[%s3 + $0x18] sm:$0xff]
  %v75 = vld [vmem:[%s3 + $0x20] sm:$0xff]
  %v76 = vld [vmem:[%s3 + $0x28] sm:$0xff]
  %v77 = vld [vmem:[%s3 + $0x30] sm:$0xff]
  %v78 = vld [vmem:[%s3 + $0x38] sm:$0xff]
  %v79 = vld [vmem:[%s3 + $0x40] sm:$0xff]
  %v80 = vld [vmem:[%s3 + $0x48] sm:$0xff]
  %v81 = vld [vmem:[%s3 + $0x50] sm:$0xff]
  %v82 = vld [vmem:[%s3 + $0x58] sm:$0xff]
  %v83 = vld [vmem:[%s3 + $0x60] sm:$0xff]
  %v84 = vld [vmem:[%s3 + $0x68] sm:$0xff]
  %v85 = vld [vmem:[%s3 + $0x70] sm:$0xff]
  %v86 = vld [vmem:[%s3 + $0x78] sm:$0xff]
  %v87 = vld [vmem:[%s4] sm:$0x1]
  %v89 = vlaneseq
  %v90 = vshrl.u32 %v89, 7
  %v91 = vsub.s32 0, %v90
  %v92 = vrot.slane %v87, %v91
  %94 = vmatprep.subr.mxu0 0.0
  %95 = vmatpush1.msra.mxu0 %v86
  %96 = vmatprep.subr.mxu0 0.0
  %97 = vmatpush1.msra.mxu0 %v85
  %98 = vmatprep.subr.mxu0 0.0
  %99 = vmatpush1.msra.mxu0 %v84
  %100 = vmatprep.subr.mxu0 0.0
  %101 = vmatpush1.msra.mxu0 %v83
  %102 = vmatprep.subr.mxu0 0.0
  %103 = vmatpush1.msra.mxu0 %v82
  %104 = vmatprep.subr.mxu0 0.0
  %105 = vmatpush1.msra.mxu0 %v81
  %106 = vmatprep.subr.mxu0 0.0
  %107 = vmatpush1.msra.mxu0 %v80
  %108 = vmatprep.subr.mxu0 0.0
  %109 = vmatpush1.msra.mxu0 %v79
  %110 = vmatprep.subr.mxu0 0.0
  %111 = vmatpush1.msra.mxu0 %v78
  %112 = vmatprep.subr.mxu0 0.0
  %113 = vmatpush1.msra.mxu0 %v77
  %114 = vmatprep.subr.mxu0 0.0
  %115 = vmatpush1.msra.mxu0 %v76
  %116 = vmatprep.subr.mxu0 0.0
  %117 = vmatpush1.msra.mxu0 %v75
  %118 = vmatprep.subr.mxu0 0.0
  %119 = vmatpush1.msra.mxu0 %v74
  %120 = vmatprep.subr.mxu0 0.0
  %121 = vmatpush1.msra.mxu0 %v73
  %122 = vmatprep.subr.mxu0 0.0
  %123 = vmatpush1.msra.mxu0 %v72
  %124 = vmatprep.subr.mxu0 0.0
  %125 = vmatpush1.msra.mxu0 %v71
  %126 = vmatprep.subr.mxu0 0.0
  %127 = vmatpush2.msra.mxu0 0.0
  %128 = vmatprep.subr.mxu0 0.0
  %129 = vmatpush2.msra.mxu0 0.0
  %130 = vmatprep.subr.mxu0 0.0
  %131 = vmatpush2.msra.mxu0 0.0
  %132 = vmatprep.subr.mxu0 0.0
  %133 = vmatpush2.msra.mxu0 0.0
  %134 = vmatprep.subr.mxu0 0.0
  %135 = vmatpush2.msra.mxu0 0.0
  %136 = vmatprep.subr.mxu0 0.0
  %137 = vmatpush2.msra.mxu0 0.0
  %138 = vmatprep.subr.mxu0 0.0
  %139 = vmatpush2.msra.mxu0 0.0
  %140 = vmatprep.subr.mxu0 0.0
  %141 = vmatpush2.msra.mxu0 0.0
  %142 = vmatprep.subr.mxu0 0.0
  %143 = vmatpush2.msra.mxu0 0.0
  %144 = vmatprep.subr.mxu0 0.0
  %145 = vmatpush2.msra.mxu0 0.0
  %146 = vmatprep.subr.mxu0 0.0
  %147 = vmatpush2.msra.mxu0 0.0
  %148 = vmatprep.subr.mxu0 0.0
  %149 = vmatpush2.msra.mxu0 0.0
  %150 = vmatprep.subr.mxu0 0.0
  %151 = vmatpush2.msra.mxu0 0.0
  %152 = vmatprep.subr.mxu0 0.0
  %153 = vmatpush2.msra.mxu0 0.0
  %154 = vmatprep.subr.mxu0 0.0
  %155 = vmatpush2.msra.mxu0 0.0
  %156 = vmatprep.subr.mxu0 0.0
  %157 = vmatpush2.msra.mxu0 0.0
  %158 = vmatprep.mubr.f32.mxu0 0.0
  %159 = vmatmul.mubr.f32.gmra.mxu0 %v70
  %v160 = vpop.f32.mrf.mxu0
  %v161 = vadd.f32 %v92, %v160
  %v162 = vpop.f32.mrf.mxu0
  %163 = vdwg.mxu0
  %vm164 = vcmask 15360
  %165 = vst.msk [vmem:[%s5] sm:$0xff] %vm164, %v161
  // Predicated region
  $region22: #{tpu_custom_call.1} parent=0 // pred_check
    _
  $region23: #{tpu_custom_call.1} parent=0 // pred_check_branch
    %167 = sbr.rel (0) target = $region25
  $region24: #{tpu_custom_call.1} parent=0 // pred_region
    _
  $region25: #{tpu_custom_call.1} parent=0 // pred_fallthru
    _
  // Predicated region
  $region26: #{tpu_custom_call.1} parent=0 // pred_check
    _
  $region27: #{tpu_custom_call.1} parent=0 // pred_check_branch
    %169 = sbr.rel (0) target = $region29
  $region28: #{tpu_custom_call.1} parent=0 // pred_region
    _
  $region29: #{tpu_custom_call.1} parent=0 // pred_fallthru
    _

</llo_original>
